<compile_context>
chip_gen: v6e
topology: v6e:2x2x1
jax: 0.10.0
libtpu: 0.0.40
codegen_flags: <defaults>
</compile_context>

<pallas_src>
import functools

import jax
import jax.numpy as jnp
from jax import lax
from jax.experimental import pallas as pl
from jax.experimental.pallas import tpu as pltpu


_EPS_SQ = 1e-24      # == (1e-12)**2 ; rsqrt(max(sumsq, eps^2)) == 1/max(||v||, eps)
_NEG_BIG = -1e30     # masked (padded) negative columns: exp underflows to 0


def _normalize_f32(v):
    """F.normalize(dim=-1) in f32 using rsqrt (EUP) + multiply (no divide)."""
    v = v.astype(jnp.float32)
    ssq = jnp.sum(v * v, axis=-1, keepdims=True)
    return v * lax.rsqrt(jnp.maximum(ssq, _EPS_SQ))


def _prior_cont_loss_kernel(x_ref, xpos_ref, xneg_ref, bias_ref, out_ref,
                            m_scr, l_scr, pos0_scr, *, needs_mask):
    k = pl.program_id(1)
    nk = pl.num_programs(1)

    @pl.when(k == 0)
    def _init():
        # Positives: computed once per anchor tile, folded into the running state.
        pos_logits = lax.dot_general(
            x_ref[...], xpos_ref[...], (((1,), (1,)), ((), ())),
            preferred_element_type=jnp.float32)                     # [TN, P]
        pos0_scr[...] = pos_logits[:, 0:1]                          # label-0 logit
        m0 = jnp.max(pos_logits, axis=-1, keepdims=True)
        m_scr[...] = m0
        l_scr[...] = jnp.sum(jnp.exp(pos_logits - m0), axis=-1, keepdims=True)

    # Streamed, pre-normalized negatives tile: matmul + online logsumexp update.
    neg_logits = lax.dot_general(
        x_ref[...], xneg_ref[...], (((1,), (1,)), ((), ())),
        preferred_element_type=jnp.float32)                         # [TN, TM]

    if needs_mask:
        # One broadcast add; bias is 0 except on padded columns of the last tile.
        neg_logits = neg_logits + bias_ref[...]                     # [1, TM]

    m_prev = m_scr[...]
    m_new = jnp.maximum(m_prev, jnp.max(neg_logits, axis=-1, keepdims=True))
    l_scr[...] = (jnp.exp(m_prev - m_new) * l_scr[...]
                  + jnp.sum(jnp.exp(neg_logits - m_new), axis=-1, keepdims=True))
    m_scr[...] = m_new

    @pl.when(k == nk - 1)
    def _finalize():
        out_ref[...] = m_scr[...] + jnp.log(l_scr[...]) - pos0_scr[...]


def _round_up(a, b):
    return (a + b - 1) // b * b


def _vmem_estimate(tn, tm, P, D, mm_bytes, neg_buffers):
    """Rough VMEM footprint of one grid step (buffers + scratch + f32 logits temp)."""
    est = 2 * tn * D * mm_bytes            # anchors (double-buffered, resident per i)
    est += 2 * P * D * mm_bytes            # positives (resident)
    est += neg_buffers * tm * D * mm_bytes  # streamed negatives
    est += 2 * tm * 4 + 2 * tn * 4         # bias + per-row output
    est += 3 * tn * 4                      # m / l / pos0 scratch
    est += tn * tm * 4                     # neg_logits f32 intermediate
    return est


def prior_cont_loss(x, x_pos, x_negs, temperature=0.07,
                    block_n=256, block_m=512,
                    downcast_to_bf16=False,
                    neg_buffers=2,
                    vmem_budget_bytes=48 << 20):
    """InfoNCE prior-contrastive loss. x:[N,D], x_pos:[P,D], x_negs:[M,D] -> scalar."""
    N, D = x.shape
    P, _ = x_pos.shape
    M, _ = x_negs.shape
    assert P >= 1, "PriorContloss requires at least one positive (label-0 logit)."

    # bf16 inputs feed the MXU as bf16 (f32 accumulation); f32 stays f32 unless the
    # caller opts into bf16 streaming (halves HBM bytes, small precision trade).
    if x.dtype == jnp.bfloat16 or downcast_to_bf16:
        mm_dtype = jnp.bfloat16
    else:
        mm_dtype = jnp.float32
    mm_bytes = jnp.dtype(mm_dtype).itemsize
    inv_t = 1.0 / float(temperature)

    # --- Tile selection ----------------------------------------------------------
    # Clamp requested (power-of-two) block sizes to the VMEM budget (~48 MiB default
    # keeps v7x's 64 MiB safe with headroom; v5e/v6e can pass a larger budget).
    bn, bm = block_n, block_m
    while _vmem_estimate(bn, bm, P, D, mm_bytes, neg_buffers) > vmem_budget_bytes and bm > 256:
        bm //= 2
    while _vmem_estimate(bn, bm, P, D, mm_bytes, neg_buffers) > vmem_budget_bytes and bn > 128:
        bn //= 2

    tn = bn if N >= bn else _round_up(N, 8)
    tm = bm if M >= bm else _round_up(M, 8)

    # v7x megacore: make sure the parallel i axis has >= 2 anchor tiles when possible.
    if _round_up(N, tn) // tn < 2 and N > 8:
        tn = _round_up((N + 1) // 2, 8)

    n_pad = _round_up(N, tn)
    m_pad = _round_up(M, tm)
    needs_mask = (m_pad != M)

    # --- Wrapper-side normalization (one fused XLA pass, never repeated) ----------
    x_n = (_normalize_f32(x) * inv_t).astype(mm_dtype)       # fold 1/T into anchors
    xp_n = _normalize_f32(x_pos).astype(mm_dtype)
    xn_n = _normalize_f32(x_negs).astype(mm_dtype)

    if n_pad != N:
        x_n = jnp.pad(x_n, ((0, n_pad - N), (0, 0)))          # zero rows, sliced off
    if m_pad != M:
        xn_n = jnp.pad(xn_n, ((0, m_pad - M), (0, 0)))         # masked via bias below

    # [1, m_pad] additive column bias: 0 on valid columns, -1e30 on padded columns.
    bias = jnp.where(jnp.arange(m_pad) < M, 0.0, _NEG_BIG).astype(jnp.float32)
    bias = bias.reshape(1, m_pad)

    grid = (n_pad // tn, m_pad // tm)

    kernel = functools.partial(_prior_cont_loss_kernel, needs_mask=needs_mask)

    neg_spec_kwargs = {}
    if neg_buffers > 2:
        neg_spec_kwargs["pipeline_mode"] = pl.Buffered(neg_buffers)

    vmem_limit = int(min(max(_vmem_estimate(tn, tm, P, D, mm_bytes, neg_buffers)
                             + (16 << 20), 32 << 20), 64 << 20))

    per_row = pl.pallas_call(
        kernel,
        out_shape=jax.ShapeDtypeStruct((n_pad, 1), jnp.float32),
        grid_spec=pltpu.PrefetchScalarGridSpec(
            num_scalar_prefetch=0,
            grid=grid,
            in_specs=[
                pl.BlockSpec((tn, D), lambda i, k: (i, 0)),   # anchors (resident per i)
                pl.BlockSpec((P, D), lambda i, k: (0, 0)),    # positives (whole, small)
                pl.BlockSpec((tm, D), lambda i, k: (k, 0),    # negatives (streamed)
                             **neg_spec_kwargs),
                pl.BlockSpec((1, tm), lambda i, k: (0, k)),   # column bias (tiny)
            ],
            out_specs=pl.BlockSpec((tn, 1), lambda i, k: (i, 0)),
            scratch_shapes=[
                pltpu.VMEM((tn, 1), jnp.float32),  # running max m
                pltpu.VMEM((tn, 1), jnp.float32),  # running sum l
                pltpu.VMEM((tn, 1), jnp.float32),  # positive (label 0) logit
            ],
        ),
        compiler_params=pltpu.CompilerParams(
            dimension_semantics=("parallel", "arbitrary"),
            vmem_limit_bytes=vmem_limit),
    )(x_n, xp_n, xn_n, bias)

    return jnp.mean(per_row[:N, 0])


if __name__ == "__main__":
    key = jax.random.PRNGKey(0)
    k1, k2, k3 = jax.random.split(key, 3)

    # Small shapes that still exercise the grid, padding and masking paths.
    N, P, M, D = 20, 8, 300, 32
    x = jax.random.normal(k1, (N, D), dtype=jnp.float32)
    x_pos = jax.random.normal(k2, (P, D), dtype=jnp.float32)
    x_negs = jax.random.normal(k3, (M, D), dtype=jnp.float32)

    # Pure-JAX reference (same math as the PyTorch module).
    def ref(xa, xp, xn, t=0.07):
        def nrm(v):
            n = jnp.sqrt(jnp.sum(v * v, axis=-1, keepdims=True))
            return v / jnp.maximum(n, 1e-12)
        xa, xp, xn = nrm(xa), nrm(xp), nrm(xn)
        logits = jnp.concatenate([xa @ xp.T, xa @ xn.T], axis=1) / t
        lse = jax.scipy.special.logsumexp(logits, axis=1)
        return jnp.mean(lse - logits[:, 0])

    ref_loss = ref(x, x_pos, x_negs)

    # 1) Small explicit tiles: multi-tile grid on both axes + column-padding mask.
    loss_small = prior_cont_loss(x, x_pos, x_negs, temperature=0.07,
                                 block_n=8, block_m=128)
    loss_small = jax.block_until_ready(loss_small)
    assert jnp.allclose(loss_small, ref_loss, atol=1e-4, rtol=1e-5), (
        float(loss_small), float(ref_loss))

    # 2) Default tiles: exercises the VMEM clamp / megacore tn-split path.
    loss_default = prior_cont_loss(x, x_pos, x_negs, temperature=0.07)
    loss_default = jax.block_until_ready(loss_default)
    assert jnp.allclose(loss_default, ref_loss, atol=1e-4, rtol=1e-5), (
        float(loss_default), float(ref_loss))

    print("KERNEL_OK")
</pallas_src>

<mosaic_0001>
module attributes {stable_mosaic.version = 11 : i64} {
  func.func @_prior_cont_loss_kernel(%arg0: i32, %arg1: i32, %arg2: memref<8x32xf32, #tpu.memory_space<vmem>>, %arg3: memref<8x32xf32, #tpu.memory_space<vmem>>, %arg4: memref<128x32xf32, #tpu.memory_space<vmem>>, %arg5: memref<1x128xf32, #tpu.memory_space<vmem>>, %arg6: memref<8x1xf32, #tpu.memory_space<vmem>>, %arg7: memref<8x1xf32, #tpu.memory_space<vmem>>, %arg8: memref<8x1xf32, #tpu.memory_space<vmem>>, %arg9: memref<8x1xf32, #tpu.memory_space<vmem>>) attributes {dimension_semantics = [#tpu.dimension_semantics<parallel>, #tpu.dimension_semantics<arbitrary>], iteration_bounds = array<i64: 3, 3>, scalar_prefetch = 0 : i64, scratch_operands = 3 : i64, tpu.core_type = #tpu.core_type<tc>, window_params = [{transform_indices = @transform_0, window_bounds = array<i64: 8, 32>}, {pipeline_mode = #tpu.pipeline_mode<synchronous>, transform_indices = @transform_1, window_bounds = array<i64: 8, 32>}, {transform_indices = @transform_2, window_bounds = array<i64: 128, 32>}, {transform_indices = @transform_3, window_bounds = array<i64: 1, 128>}, {transform_indices = @transform_4, window_bounds = array<i64: 8, 1>}]} {
    %c0_i32 = arith.constant 0 : i32
    %0 = arith.cmpi eq, %arg1, %c0_i32 : i32
    %1 = arith.extui %0 : i1 to i32
    %c0_i32_0 = arith.constant 0 : i32
    %2 = arith.cmpi ne, %1, %c0_i32_0 : i32
    scf.if %2 {
      %c0_17 = arith.constant 0 : index
      %c0_18 = arith.constant 0 : index
      %28 = vector.load %arg2[%c0_17, %c0_18] : memref<8x32xf32, #tpu.memory_space<vmem>>, vector<8x32xf32>
      %c0_19 = arith.constant 0 : index
      %c0_20 = arith.constant 0 : index
      %29 = vector.load %arg3[%c0_19, %c0_20] : memref<8x32xf32, #tpu.memory_space<vmem>>, vector<8x32xf32>
      %cst_21 = arith.constant dense<0.000000e+00> : vector<8x8xf32>
      %30 = tpu.matmul %28, %29, %cst_21 {dimension_numbers = #tpu.dot_dimension_numbers<[1], [1], [0], [0], [0, 0, 1, 0], [], []>} : vector<8x32xf32>, vector<8x32xf32>, vector<8x8xf32> -> vector<8x8xf32>
      %31 = vector.extract_strided_slice %30 {offsets = [0, 0], sizes = [8, 1], strides = [1, 1]} : vector<8x8xf32> to vector<8x1xf32>
      %c0_22 = arith.constant 0 : index
      %c0_23 = arith.constant 0 : index
      %32 = vector.load %arg9[%c0_22, %c0_23] : memref<8x1xf32, #tpu.memory_space<vmem>>, vector<8x1xf32>
      tpu.vector_store %arg9[%c0_22, %c0_23], %31 {strides = array<i32>} : memref<8x1xf32, #tpu.memory_space<vmem>>, vector<8x1xf32>,
      %cst_24 = arith.constant dense<0xFF800000> : vector<8xf32>
      %33 = vector.multi_reduction <maximumf>, %30, %cst_24 [1] : vector<8x8xf32> to vector<8xf32>
      %34 = vector.shape_cast %33 : vector<8xf32> to vector<8x1xf32>
      %c0_25 = arith.constant 0 : index
      %c0_26 = arith.constant 0 : index
      %35 = vector.load %arg7[%c0_25, %c0_26] : memref<8x1xf32, #tpu.memory_space<vmem>>, vector<8x1xf32>
      tpu.vector_store %arg7[%c0_25, %c0_26], %34 {strides = array<i32>} : memref<8x1xf32, #tpu.memory_space<vmem>>, vector<8x1xf32>,
      %36 = vector.broadcast %34 : vector<8x1xf32> to vector<8x8xf32>
      %37 = arith.subf %30, %36 : vector<8x8xf32>
      %38 = math.exp %37 : vector<8x8xf32>
      %cst_27 = arith.constant dense<0.000000e+00> : vector<8xf32>
      %39 = vector.multi_reduction <add>, %38, %cst_27 [1] : vector<8x8xf32> to vector<8xf32>
      %40 = vector.shape_cast %39 : vector<8xf32> to vector<8x1xf32>
      %c0_28 = arith.constant 0 : index
      %c0_29 = arith.constant 0 : index
      %41 = vector.load %arg8[%c0_28, %c0_29] : memref<8x1xf32, #tpu.memory_space<vmem>>, vector<8x1xf32>
      tpu.vector_store %arg8[%c0_28, %c0_29], %40 {strides = array<i32>} : memref<8x1xf32, #tpu.memory_space<vmem>>, vector<8x1xf32>,
    } else {
    }
    %c0 = arith.constant 0 : index
    %c0_1 = arith.constant 0 : index
    %3 = vector.load %arg2[%c0, %c0_1] : memref<8x32xf32, #tpu.memory_space<vmem>>, vector<8x32xf32>
    %c0_2 = arith.constant 0 : index
    %c0_3 = arith.constant 0 : index
    %4 = vector.load %arg4[%c0_2, %c0_3] : memref<128x32xf32, #tpu.memory_space<vmem>>, vector<128x32xf32>
    %cst = arith.constant dense<0.000000e+00> : vector<8x128xf32>
    %5 = tpu.matmul %3, %4, %cst {dimension_numbers = #tpu.dot_dimension_numbers<[1], [1], [0], [0], [0, 0, 1, 0], [], []>} : vector<8x32xf32>, vector<128x32xf32>, vector<8x128xf32> -> vector<8x128xf32>
    %c0_4 = arith.constant 0 : index
    %c0_5 = arith.constant 0 : index
    %6 = vector.load %arg5[%c0_4, %c0_5] : memref<1x128xf32, #tpu.memory_space<vmem>>, vector<1x128xf32>
    %7 = vector.broadcast %6 : vector<1x128xf32> to vector<8x128xf32>
    %8 = arith.addf %5, %7 : vector<8x128xf32>
    %c0_6 = arith.constant 0 : index
    %c0_7 = arith.constant 0 : index
    %9 = vector.load %arg7[%c0_6, %c0_7] : memref<8x1xf32, #tpu.memory_space<vmem>>, vector<8x1xf32>
    %cst_8 = arith.constant dense<0xFF800000> : vector<8xf32>
    %10 = vector.multi_reduction <maximumf>, %8, %cst_8 [1] : vector<8x128xf32> to vector<8xf32>
    %11 = vector.shape_cast %10 : vector<8xf32> to vector<8x1xf32>
    %12 = arith.maximumf %9, %11 : vector<8x1xf32>
    %13 = arith.subf %9, %12 : vector<8x1xf32>
    %14 = math.exp %13 : vector<8x1xf32>
    %c0_9 = arith.constant 0 : index
    %c0_10 = arith.constant 0 : index
    %15 = vector.load %arg8[%c0_9, %c0_10] : memref<8x1xf32, #tpu.memory_space<vmem>>, vector<8x1xf32>
    %16 = arith.mulf %14, %15 : vector<8x1xf32>
    %17 = vector.broadcast %12 : vector<8x1xf32> to vector<8x128xf32>
    %18 = arith.subf %8, %17 : vector<8x128xf32>
    %19 = math.exp %18 : vector<8x128xf32>
    %cst_11 = arith.constant dense<0.000000e+00> : vector<8xf32>
    %20 = vector.multi_reduction <add>, %19, %cst_11 [1] : vector<8x128xf32> to vector<8xf32>
    %21 = vector.shape_cast %20 : vector<8xf32> to vector<8x1xf32>
    %22 = arith.addf %16, %21 : vector<8x1xf32>
    %c0_12 = arith.constant 0 : index
    %c0_13 = arith.constant 0 : index
    %23 = vector.load %arg8[%c0_12, %c0_13] : memref<8x1xf32, #tpu.memory_space<vmem>>, vector<8x1xf32>
    tpu.vector_store %arg8[%c0_12, %c0_13], %22 {strides = array<i32>} : memref<8x1xf32, #tpu.memory_space<vmem>>, vector<8x1xf32>,
    %c0_14 = arith.constant 0 : index
    %c0_15 = arith.constant 0 : index
    %24 = vector.load %arg7[%c0_14, %c0_15] : memref<8x1xf32, #tpu.memory_space<vmem>>, vector<8x1xf32>
    tpu.vector_store %arg7[%c0_14, %c0_15], %12 {strides = array<i32>} : memref<8x1xf32, #tpu.memory_space<vmem>>, vector<8x1xf32>,
    %c2_i32 = arith.constant 2 : i32
    %25 = arith.cmpi eq, %arg1, %c2_i32 : i32
    %26 = arith.extui %25 : i1 to i32
    %c0_i32_16 = arith.constant 0 : i32
    %27 = arith.cmpi ne, %26, %c0_i32_16 : i32
    scf.if %27 {
      %c0_17 = arith.constant 0 : index
      %c0_18 = arith.constant 0 : index
      %28 = vector.load %arg7[%c0_17, %c0_18] : memref<8x1xf32, #tpu.memory_space<vmem>>, vector<8x1xf32>
      %c0_19 = arith.constant 0 : index
      %c0_20 = arith.constant 0 : index
      %29 = vector.load %arg8[%c0_19, %c0_20] : memref<8x1xf32, #tpu.memory_space<vmem>>, vector<8x1xf32>
      %30 = math.log %29 : vector<8x1xf32>
      %31 = arith.addf %28, %30 : vector<8x1xf32>
      %c0_21 = arith.constant 0 : index
      %c0_22 = arith.constant 0 : index
      %32 = vector.load %arg9[%c0_21, %c0_22] : memref<8x1xf32, #tpu.memory_space<vmem>>, vector<8x1xf32>
      %33 = arith.subf %31, %32 : vector<8x1xf32>
      %c0_23 = arith.constant 0 : index
      %c0_24 = arith.constant 0 : index
      %34 = vector.load %arg6[%c0_23, %c0_24] : memref<8x1xf32, #tpu.memory_space<vmem>>, vector<8x1xf32>
      tpu.vector_store %arg6[%c0_23, %c0_24], %33 {strides = array<i32>} : memref<8x1xf32, #tpu.memory_space<vmem>>, vector<8x1xf32>,
    } else {
    }
    return
  }
  func.func @transform_0(%arg0: i32, %arg1: i32) -> (i32, i32) {
    %c0_i32 = arith.constant 0 : i32
    %c0_i32_0 = arith.constant 0 : i32
    return %arg0, %c0_i32 : i32, i32
  }
  func.func @transform_1(%arg0: i32, %arg1: i32) -> (i32, i32) {
    %c0_i32 = arith.constant 0 : i32
    %c0_i32_0 = arith.constant 0 : i32
    %c0_i32_1 = arith.constant 0 : i32
    return %c0_i32, %c0_i32_0 : i32, i32
  }
  func.func @transform_2(%arg0: i32, %arg1: i32) -> (i32, i32) {
    %c0_i32 = arith.constant 0 : i32
    %c0_i32_0 = arith.constant 0 : i32
    return %arg1, %c0_i32 : i32, i32
  }
  func.func @transform_3(%arg0: i32, %arg1: i32) -> (i32, i32) {
    %c0_i32 = arith.constant 0 : i32
    %c0_i32_0 = arith.constant 0 : i32
    return %c0_i32, %arg1 : i32, i32
  }
  func.func @transform_4(%arg0: i32, %arg1: i32) -> (i32, i32) {
    %c0_i32 = arith.constant 0 : i32
    %c0_i32_0 = arith.constant 0 : i32
    return %arg0, %c0_i32 : i32, i32
  }
}

</mosaic_0001>

<llo_original>
// kernel: tpu_custom_call.1
$region0: #{tpu_custom_call.1}
  #allocation0 [shape = 'u32[]', space=smem, size = 0x4, offset = 0x4, fixed_abs, tag = 'smem constant byte address 0x4 - core index']
  #allocation1 [shape = 'u32[144,128]{1,0:T(1,128)}', space=vmem, size = 0x12000, scoped, tag = 'internal scratch']
  #allocation2 [shape = 'f32[8,1]{1,0:T(8,128)}', space=vmem, size = 0x1000, scoped, tag = 'scratch operand']
  #allocation3 [shape = 'f32[8,1]{1,0:T(8,128)}', space=vmem, size = 0x1000, scoped, tag = 'scratch operand']
  #allocation4 [shape = 'f32[8,1]{1,0:T(8,128)}', space=vmem, size = 0x1000, scoped, tag = 'scratch operand']
  %s0 = inlined_call_operand.vmem [shape: f32[24,32], index: 0, kind: input, shape index: {}]
  %s1 = inlined_call_operand.vmem [shape: f32[8,32], index: 1, kind: input, shape index: {}]
  %s2 = inlined_call_operand.vmem [shape: f32[384,32], index: 2, kind: input, shape index: {}]
  %s3 = inlined_call_operand.vmem [shape: f32[1,384], index: 3, kind: input, shape index: {}]
  %s4 = inlined_call_operand.vmem [shape: f32[24,1], index: 4, kind: output, shape index: {}]
  %s5 = sld [smem:[#allocation0]]
  $region57: #{tpu_custom_call.1} parent=0
    _
  %s7 = ssub.s32 1, %s5
  %s8 = scalar_select 0, %s7, %s5
  loop: start=0, step=1, limit=11
  $region2: #{tpu_custom_call.1} parent=0 // loop_pre_header
    _
  $region3: #{tpu_custom_call.1} parent=0 // loop_header
    %s10 = sphi 0, %s14
    %p11 = scmp.ge.s32.totalorder %s10, 11
    %s17 = sphi 0, %s29
    %s18 = sphi 0, %s25
    %s19 = sphi 0, %s17
    %s20 = sphi 0, %s18
    %s21 = sphi 0, %s19
    %s22 = sphi 0, %s20
    %s32 = sphi 0, %s34
    %s35 = sphi 0, %s32
    %s36 = sphi 0, %s35
    %s52 = sphi 0, %s36
    %s56 = sphi 0, %s56
    %s58 = sphi 0, %s56
    %s59 = sphi 0, %s58
    %s73 = sphi 0, %s59
    %s79 = sphi 0, %s81
    %s82 = sphi 0, %s79
    %s83 = sphi 0, %s82
    %s99 = sphi 0, %s83
    %s105 = sphi 0, %s107
    %s108 = sphi 0, %s105
    %s109 = sphi 0, %s108
    %s125 = sphi 0, %s109
    %s131 = sphi 0, %s133
    %s134 = sphi 0, %s131
    %s135 = sphi 0, %s134
    %s151 = sphi 0, %s135
  $region4: #{tpu_custom_call.1} parent=0 // loop_header_branch
    %13 = sbr.rel (%p11) target = $region8
  $region5: #{tpu_custom_call.1} parent=0 // loop_body
    %s15 = ssub.s32 %s10, 1
    %s16 = ssub.s32 %s10, 2
    %s23 = sadd.s32 1, %s18
    %p24 = scmp.ge.s32.totalorder %s23, 3
    %s25 = scalar_select %p24, 0, %s23
    %s26 = sadd.s32 1, %s17
    %s27 = scalar_select %p24, %s26, %s17
    %p28 = scmp.ge.s32.totalorder %s27, 3
    %s29 = scalar_select %p28, 0, %s27
    %s30 = ssub.s32 %s17, %s29
    %p31 = scmp.eq.s32.totalorder %s30, 0
    %s33 = sadd.s32 %s32, 1
    %s34 = scalar_select %p31, %s32, %s33
    %p37 = pneg %p31
    %p38 = scmp.eq.s32.totalorder %s10, 8
    %p39 = por %p37, %p38
    %p40 = scmp.ne.s32.totalorder %s32, %s35
    %p41 = scmp.eq.s32.totalorder %s10, 0
    %p42 = por %p40, %p41
    %p43 = scmp.ne.s32.totalorder %s32, %s35
    %p44 = scmp.eq.s32.totalorder %s15, 8
    %p45 = por %p43, %p44
    %p46 = scmp.ne.s32.totalorder %s35, %s36
    %p47 = scmp.eq.s32.totalorder %s15, 0
    %p48 = por %p46, %p47
    %p49 = scmp.ne.s32.totalorder %s35, %s36
    %p50 = scmp.eq.s32.totalorder %s16, 8
    %p51 = por %p49, %p50
    %p53 = scmp.ne.s32.totalorder %s36, %s52
    %p54 = scmp.eq.s32.totalorder %s16, 0
    %p55 = por %p53, %p54
    %s57 = sadd.s32 %s56, 1
    %p60 = scmp.eq.s32.totalorder %s10, 8
    %p61 = scmp.ne.s32.totalorder %s56, %s58
    %p62 = scmp.eq.s32.totalorder %s10, 0
    %p63 = por %p61, %p62
    %p64 = scmp.ne.s32.totalorder %s56, %s58
    %p65 = scmp.eq.s32.totalorder %s15, 8
    %p66 = por %p64, %p65
    %p67 = scmp.ne.s32.totalorder %s58, %s59
    %p68 = scmp.eq.s32.totalorder %s15, 0
    %p69 = por %p67, %p68
    %p70 = scmp.ne.s32.totalorder %s58, %s59
    %p71 = scmp.eq.s32.totalorder %s16, 8
    %p72 = por %p70, %p71
    %p74 = scmp.ne.s32.totalorder %s59, %s73
    %p75 = scmp.eq.s32.totalorder %s16, 0
    %p76 = por %p74, %p75
    %s77 = ssub.s32 %s18, %s25
    %p78 = scmp.eq.s32.totalorder %s77, 0
    %s80 = sadd.s32 %s79, 1
    %s81 = scalar_select %p78, %s79, %s80
    %p84 = pneg %p78
    %p85 = scmp.eq.s32.totalorder %s10, 8
    %p86 = por %p84, %p85
    %p87 = scmp.ne.s32.totalorder %s79, %s82
    %p88 = scmp.eq.s32.totalorder %s10, 0
    %p89 = por %p87, %p88
    %p90 = scmp.ne.s32.totalorder %s79, %s82
    %p91 = scmp.eq.s32.totalorder %s15, 8
    %p92 = por %p90, %p91
    %p93 = scmp.ne.s32.totalorder %s82, %s83
    %p94 = scmp.eq.s32.totalorder %s15, 0
    %p95 = por %p93, %p94
    %p96 = scmp.ne.s32.totalorder %s82, %s83
    %p97 = scmp.eq.s32.totalorder %s16, 8
    %p98 = por %p96, %p97
    %p100 = scmp.ne.s32.totalorder %s83, %s99
    %p101 = scmp.eq.s32.totalorder %s16, 0
    %p102 = por %p100, %p101
    %s103 = ssub.s32 %s18, %s25
    %p104 = scmp.eq.s32.totalorder %s103, 0
    %s106 = sadd.s32 %s105, 1
    %s107 = scalar_select %p104, %s105, %s106
    %p110 = pneg %p104
    %p111 = scmp.eq.s32.totalorder %s10, 8
    %p112 = por %p110, %p111
    %p113 = scmp.ne.s32.totalorder %s105, %s108
    %p114 = scmp.eq.s32.totalorder %s10, 0
    %p115 = por %p113, %p114
    %p116 = scmp.ne.s32.totalorder %s105, %s108
    %p117 = scmp.eq.s32.totalorder %s15, 8
    %p118 = por %p116, %p117
    %p119 = scmp.ne.s32.totalorder %s108, %s109
    %p120 = scmp.eq.s32.totalorder %s15, 0
    %p121 = por %p119, %p120
    %p122 = scmp.ne.s32.totalorder %s108, %s109
    %p123 = scmp.eq.s32.totalorder %s16, 8
    %p124 = por %p122, %p123
    %p126 = scmp.ne.s32.totalorder %s109, %s125
    %p127 = scmp.eq.s32.totalorder %s16, 0
    %p128 = por %p126, %p127
    %s129 = ssub.s32 %s17, %s29
    %p130 = scmp.eq.s32.totalorder %s129, 0
    %s132 = sadd.s32 %s131, 1
    %s133 = scalar_select %p130, %s131, %s132
    %p136 = pneg %p130
    %p137 = scmp.eq.s32.totalorder %s10, 8
    %p138 = por %p136, %p137
    %p139 = scmp.ne.s32.totalorder %s131, %s134
    %p140 = scmp.eq.s32.totalorder %s10, 0
    %p141 = por %p139, %p140
    %p142 = scmp.ne.s32.totalorder %s131, %s134
    %p143 = scmp.eq.s32.totalorder %s15, 8
    %p144 = por %p142, %p143
    %p145 = scmp.ne.s32.totalorder %s134, %s135
    %p146 = scmp.eq.s32.totalorder %s15, 0
    %p147 = por %p145, %p146
    %p148 = scmp.ne.s32.totalorder %s134, %s135
    %p149 = scmp.eq.s32.totalorder %s16, 8
    %p150 = por %p148, %p149
    %p152 = scmp.ne.s32.totalorder %s135, %s151
    %p153 = scmp.eq.s32.totalorder %s16, 0
    %p154 = por %p152, %p153
    %p155 = scmp.le.s32.totalorder 1, %s10
    %p156 = scmp.lt.s32.totalorder %s10, 10
    %p157 = pnand %p155, %p156
    %p158 = pneg %p157
    // Predicated region
    $region9: #{tpu_custom_call.1} parent=5 // pred_check
      _
    $region10: #{tpu_custom_call.1} parent=5 // pred_check_branch
      %160 = sbr.rel (%p157) target = $region12
    $region11: #{tpu_custom_call.1} parent=5 // pred_region
      %s161 = ssub.s32 %s10, 1
      // Predicated region
      $region13: #{tpu_custom_call.1} parent=11 // pred_check
        %p162 = pneg %p69
      $region14: #{tpu_custom_call.1} parent=11 // pred_check_branch
        %164 = sbr.rel (%p162) target = $region16
      $region15: #{tpu_custom_call.1} parent=11 // pred_region
        _
      $region16: #{tpu_custom_call.1} parent=11 // pred_fallthru
        _
    $region12: #{tpu_custom_call.1} parent=5 // pred_fallthru
      _
    %p165 = scmp.lt.s32.totalorder %s10, 9
    // Predicated region
    $region17: #{tpu_custom_call.1} parent=5 // pred_check
      %p166 = pneg %p165
    $region18: #{tpu_custom_call.1} parent=5 // pred_check_branch
      %168 = sbr.rel (%p166) target = $region20
    $region19: #{tpu_custom_call.1} parent=5 // pred_region
      // Predicated region
      $region21: #{tpu_custom_call.1} parent=19 // pred_check
        %p169 = pneg %p42
      $region22: #{tpu_custom_call.1} parent=19 // pred_check_branch
        %171 = sbr.rel (%p169) target = $region24
      $region23: #{tpu_custom_call.1} parent=19 // pred_region
        %p172 = scmp.lt.s32.totalorder %s17, 2
        %s173 = scalar_select %p172, %s17, 2
        %s174 = smul.addr %s173, 8
        %s175 = scalar_lea.vmem %s0, %s174
      $region24: #{tpu_custom_call.1} parent=19 // pred_fallthru
        _
      // Predicated region
      $region25: #{tpu_custom_call.1} parent=19 // pred_check
        %p176 = pneg %p89
      $region26: #{tpu_custom_call.1} parent=19 // pred_check_branch
        %178 = sbr.rel (%p176) target = $region28
      $region27: #{tpu_custom_call.1} parent=19 // pred_region
        %s179 = smul.u32 16, %s18
        %p180 = scmp.lt.s32.totalorder %s179, 47
        %s181 = scalar_select %p180, %s179, 47
        %s182 = smul.addr %s181, 8
        %s183 = scalar_lea.vmem %s2, %s182
        %s184 = smul.u32 16, %s18
      $region28: #{tpu_custom_call.1} parent=19 // pred_fallthru
        _
      // Predicated region
      $region29: #{tpu_custom_call.1} parent=19 // pred_check
        %p185 = pneg %p115
      $region30: #{tpu_custom_call.1} parent=19 // pred_check_branch
        %187 = sbr.rel (%p185) target = $region32
      $region31: #{tpu_custom_call.1} parent=19 // pred_region
        %p188 = scmp.lt.s32.totalorder %s18, 2
        %s189 = scalar_select %p188, %s18, 2
        %s190 = scalar_lea.vmem %s3, %s189
      $region32: #{tpu_custom_call.1} parent=19 // pred_fallthru
        _
    $region20: #{tpu_custom_call.1} parent=5 // pred_fallthru
      _
    %p191 = scmp.le.s32.totalorder 1, %s10
    %p192 = scmp.lt.s32.totalorder %s10, 10
    %p193 = pnand %p191, %p192
    %p194 = pneg %p193
    // Predicated region
    $region33: #{tpu_custom_call.1} parent=5 // pred_check
      _
    $region34: #{tpu_custom_call.1} parent=5 // pred_check_branch
      %196 = sbr.rel (%p193) target = $region36
    $region35: #{tpu_custom_call.1} parent=5 // pred_region
      %s197 = ssub.s32 %s10, 1
      %p198 = scmp.lt.s32.totalorder %s19, 2
      %s199 = scalar_select %p198, %s19, 2
      %s200 = smul.addr %s199, 8
      %s201 = scalar_lea.vmem %s0, %s200
      %p202 = pneg %p48
      %p203 = pneg %p45
      %p204 = pneg %p69
      %p205 = pneg %p66
      %s206 = smul.u32 16, %s20
      %p207 = scmp.lt.s32.totalorder %s206, 47
      %s208 = scalar_select %p207, %s206, 47
      %s209 = smul.addr %s208, 8
      %s210 = scalar_lea.vmem %s2, %s209
      %p211 = pneg %p95
      %p212 = pneg %p92
      %p213 = scmp.lt.s32.totalorder %s20, 2
      %s214 = scalar_select %p213, %s20, 2
      %s215 = scalar_lea.vmem %s3, %s214
      %p216 = pneg %p121
      %p217 = pneg %p118
      %p218 = pneg %p147
      %p219 = pneg %p144
      %p220 = scmp.lt.s32.totalorder %s19, 2
      %s221 = scalar_select %p220, %s19, 2
      %s222 = smul.addr %s221, 8
      %s223 = scalar_lea.vmem %s4, %s222
      %p224 = scmp.lt.s32.totalorder %s19, 2
      %s225 = scalar_select %p224, %s19, 2
      %s226 = smul.addr %s225, 8
      %s227 = scalar_lea.vmem %s0, %s226
      %s228 = smul.u32 16, %s20
      %p229 = scmp.lt.s32.totalorder %s228, 47
      %s230 = scalar_select %p229, %s228, 47
      %s231 = smul.addr %s230, 8
      %s232 = scalar_lea.vmem %s2, %s231
      %s233 = smul.u32 16, %s20
      %p234 = scmp.lt.s32.totalorder %s20, 2
      %s235 = scalar_select %p234, %s20, 2
      %s236 = scalar_lea.vmem %s3, %s235
      %p237 = scmp.lt.s32.totalorder %s19, 2
      %s238 = scalar_select %p237, %s19, 2
      %s239 = smul.addr %s238, 8
      %s240 = scalar_lea.vmem %s4, %s239
      %p241 = scmp.eq.s32.totalorder %s20, 0
      // Predicated region
      $region37: #{tpu_custom_call.1} parent=35 // pred_check
        %p242 = pneg %p241
      $region38: #{tpu_custom_call.1} parent=35 // pred_check_branch
        %244 = sbr.rel (%p242) target = $region40
      $region39: #{tpu_custom_call.1} parent=35 // pred_region
        %v245 = vld [vmem:[%s227] sm:$0xff]
        %v246 = vld [vmem:[%s1] sm:$0xff]
        %vm247 = vcmask 261120
        %v249 = vsel %vm247, %v245, 0
        %v252 = vsel %vm247, %v246, 0
        %254 = vmatprep.subr.mxu0 0.0
        %255 = vmatpush1.xpose.msra.mxu0 0.0
        %256 = vmatprep.subr.mxu0 0.0
        %257 = vmatpush1.xpose.msra.mxu0 0.0
        %258 = vmatprep.subr.mxu0 0.0
        %259 = vmatpush1.xpose.msra.mxu0 0.0
        %260 = vmatprep.subr.mxu0 0.0
        %261 = vmatpush1.xpose.msra.mxu0 0.0
        %262 = vmatprep.subr.mxu0 0.0
        %263 = vmatpush1.xpose.msra.mxu0 0.0
        %264 = vmatprep.subr.mxu0 0.0
        %265 = vmatpush1.xpose.msra.mxu0 0.0
        %266 = vmatprep.subr.mxu0 0.0
        %267 = vmatpush1.xpose.msra.mxu0 0.0
        %268 = vmatprep.subr.mxu0 0.0
        %269 = vmatpush1.xpose.msra.mxu0 0.0
        %270 = vmatprep.subr.mxu0 0.0
        %271 = vmatpush1.xpose.msra.mxu0 0.0
        %272 = vmatprep.subr.mxu0 0.0
        %273 = vmatpush1.xpose.msra.mxu0 0.0
        %274 = vmatprep.subr.mxu0 0.0
        %275 = vmatpush1.xpose.msra.mxu0 0.0
        %276 = vmatprep.subr.mxu0 0.0
        %277 = vmatpush1.xpose.msra.mxu0 0.0
        %278 = vmatprep.subr.mxu0 0.0
        %279 = vmatpush1.xpose.msra.mxu0 0.0
        %280 = vmatprep.subr.mxu0 0.0
        %281 = vmatpush1.xpose.msra.mxu0 0.0
        %282 = vmatprep.subr.mxu0 0.0
        %283 = vmatpush1.xpose.msra.mxu0 0.0
        %284 = vmatprep.subr.mxu0 0.0
        %285 = vmatpush1.xpose.msra.mxu0 %v252
        %286 = vmatprep.subr.mxu0 0.0
        %287 = vmatpush2.xpose.msra.mxu0 0.0
        %288 = vmatprep.subr.mxu0 0.0
        %289 = vmatpush2.xpose.msra.mxu0 0.0
        %290 = vmatprep.subr.mxu0 0.0
        %291 = vmatpush2.xpose.msra.mxu0 0.0
        %292 = vmatprep.subr.mxu0 0.0
        %293 = vmatpush2.xpose.msra.mxu0 0.0
        %294 = vmatprep.subr.mxu0 0.0
        %295 = vmatpush2.xpose.msra.mxu0 0.0
        %296 = vmatprep.subr.mxu0 0.0
        %297 = vmatpush2.xpose.msra.mxu0 0.0
        %298 = vmatprep.subr.mxu0 0.0
        %299 = vmatpush2.xpose.msra.mxu0 0.0
        %300 = vmatprep.subr.mxu0 0.0
        %301 = vmatpush2.xpose.msra.mxu0 0.0
        %302 = vmatprep.subr.mxu0 0.0
        %303 = vmatpush2.xpose.msra.mxu0 0.0
        %304 = vmatprep.subr.mxu0 0.0
        %305 = vmatpush2.xpose.msra.mxu0 0.0
        %306 = vmatprep.subr.mxu0 0.0
        %307 = vmatpush2.xpose.msra.mxu0 0.0
        %308 = vmatprep.subr.mxu0 0.0
        %309 = vmatpush2.xpose.msra.mxu0 0.0
        %310 = vmatprep.subr.mxu0 0.0
        %311 = vmatpush2.xpose.msra.mxu0 0.0
        %312 = vmatprep.subr.mxu0 0.0
        %313 = vmatpush2.xpose.msra.mxu0 0.0
        %314 = vmatprep.subr.mxu0 0.0
        %315 = vmatpush2.xpose.msra.mxu0 0.0
        %316 = vmatprep.subr.mxu0 0.0
        %317 = vmatpush2.xpose.msra.mxu0 0.0
        %318 = vmatprep.mubr.f32.mxu0 0.0
        %319 = vmatmul.mubr.f32.gmra.mxu0 %v249
        %v320 = vpop.f32.mrf.mxu0
        %v321 = vadd.f32 0.0, %v320
        %v322 = vpop.f32.mrf.mxu0
        %323 = vdwg.mxu0
        %vm324 = vcmask 7168
        %325 = vst.msk [vmem:[#allocation4] sm:$0xff] %vm324, %v321
        %vm326 = vcmask 64512
        %v327 = vsel %vm326, %v321, -inf
        %328 = vmax.xlane.f32.xlu0 %v327
        %v329 = vpop.xlane.xlu0 %328
        %330 = vst.msk [vmem:[#allocation2] sm:$0xff] %vm324, %v329
        %v331 = vsub.f32 %v321, %v329
        %v332 = vmul.f32 %v331, 1.442695
        %v333 = vpow.pop %v332
        %v334 = vsel %vm326, %v333, 0.0
        %335 = vadd.xlane.f32.xlu0 %v334
        %v336 = vpop.xlane.xlu0 %335
        %337 = vst.msk [vmem:[#allocation3] sm:$0xff] %vm324, %v336
      $region40: #{tpu_custom_call.1} parent=35 // pred_fallthru
        _
      %v338 = vld [vmem:[%s227] sm:$0xff]
      %v339 = vld [vmem:[%s232] sm:$0xff]
      %v340 = vld [vmem:[%s232 + $0x8] sm:$0xff]
      %v341 = vld [vmem:[%s232 + $0x10] sm:$0xff]
      %v342 = vld [vmem:[%s232 + $0x18] sm:$0xff]
      %v343 = vld [vmem:[%s232 + $0x20] sm:$0xff]
      %v344 = vld [vmem:[%s232 + $0x28] sm:$0xff]
      %v345 = vld [vmem:[%s232 + $0x30] sm:$0xff]
      %v346 = vld [vmem:[%s232 + $0x38] sm:$0xff]
      %v347 = vld [vmem:[%s232 + $0x40] sm:$0xff]
      %v348 = vld [vmem:[%s232 + $0x48] sm:$0xff]
      %v349 = vld [vmem:[%s232 + $0x50] sm:$0xff]
      %v350 = vld [vmem:[%s232 + $0x58] sm:$0xff]
      %v351 = vld [vmem:[%s232 + $0x60] sm:$0xff]
      %v352 = vld [vmem:[%s232 + $0x68] sm:$0xff]
      %v353 = vld [vmem:[%s232 + $0x70] sm:$0xff]
      %v354 = vld [vmem:[%s232 + $0x78] sm:$0xff]
      %v355 = vld [vmem:[%s236] sm:$0x1]
      %v357 = vlaneseq
      %v358 = vshrl.u32 %v357, 7
      %v359 = vsub.s32 0, %v358
      %v360 = vrot.slane %v355, %v359
      %vm362 = vcmask 261120
      %v364 = vsel %vm362, %v338, 0
      %v367 = vsel %vm362, %v339, 0
      %v370 = vsel %vm362, %v340, 0
      %v373 = vsel %vm362, %v341, 0
      %v376 = vsel %vm362, %v342, 0
      %v379 = vsel %vm362, %v343, 0
      %v382 = vsel %vm362, %v344, 0
      %v385 = vsel %vm362, %v345, 0
      %v388 = vsel %vm362, %v346, 0
      %v391 = vsel %vm362, %v347, 0
      %v394 = vsel %vm362, %v348, 0
      %v397 = vsel %vm362, %v349, 0
      %v400 = vsel %vm362, %v350, 0
      %v403 = vsel %vm362, %v351, 0
      %v406 = vsel %vm362, %v352, 0
      %v409 = vsel %vm362, %v353, 0
      %v412 = vsel %vm362, %v354, 0
      %414 = vmatprep.subr.mxu0 0.0
      %415 = vmatpush1.xpose.msra.mxu0 %v412
      %416 = vmatprep.subr.mxu0 0.0
      %417 = vmatpush1.xpose.msra.mxu0 %v409
      %418 = vmatprep.subr.mxu0 0.0
      %419 = vmatpush1.xpose.msra.mxu0 %v406
      %420 = vmatprep.subr.mxu0 0.0
      %421 = vmatpush1.xpose.msra.mxu0 %v403
      %422 = vmatprep.subr.mxu0 0.0
      %423 = vmatpush1.xpose.msra.mxu0 %v400
      %424 = vmatprep.subr.mxu0 0.0
      %425 = vmatpush1.xpose.msra.mxu0 %v397
      %426 = vmatprep.subr.mxu0 0.0
      %427 = vmatpush1.xpose.msra.mxu0 %v394
      %428 = vmatprep.subr.mxu0 0.0
      %429 = vmatpush1.xpose.msra.mxu0 %v391
      %430 = vmatprep.subr.mxu0 0.0
      %431 = vmatpush1.xpose.msra.mxu0 %v388
      %432 = vmatprep.subr.mxu0 0.0
      %433 = vmatpush1.xpose.msra.mxu0 %v385
      %434 = vmatprep.subr.mxu0 0.0
      %435 = vmatpush1.xpose.msra.mxu0 %v382
      %436 = vmatprep.subr.mxu0 0.0
      %437 = vmatpush1.xpose.msra.mxu0 %v379
      %438 = vmatprep.subr.mxu0 0.0
      %439 = vmatpush1.xpose.msra.mxu0 %v376
      %440 = vmatprep.subr.mxu0 0.0
      %441 = vmatpush1.xpose.msra.mxu0 %v373
      %442 = vmatprep.subr.mxu0 0.0
      %443 = vmatpush1.xpose.msra.mxu0 %v370
      %444 = vmatprep.subr.mxu0 0.0
      %445 = vmatpush1.xpose.msra.mxu0 %v367
      %446 = vmatprep.subr.mxu0 0.0
      %447 = vmatpush2.xpose.msra.mxu0 0.0
      %448 = vmatprep.subr.mxu0 0.0
      %449 = vmatpush2.xpose.msra.mxu0 0.0
      %450 = vmatprep.subr.mxu0 0.0
      %451 = vmatpush2.xpose.msra.mxu0 0.0
      %452 = vmatprep.subr.mxu0 0.0
      %453 = vmatpush2.xpose.msra.mxu0 0.0
      %454 = vmatprep.subr.mxu0 0.0
      %455 = vmatpush2.xpose.msra.mxu0 0.0
      %456 = vmatprep.subr.mxu0 0.0
      %457 = vmatpush2.xpose.msra.mxu0 0.0
      %458 = vmatprep.subr.mxu0 0.0
      %459 = vmatpush2.xpose.msra.mxu0 0.0
      %460 = vmatprep.subr.mxu0 0.0
      %461 = vmatpush2.xpose.msra.mxu0 0.0
      %462 = vmatprep.subr.mxu0 0.0
      %463 = vmatpush2.xpose.msra.mxu0 0.0
      %464 = vmatprep.subr.mxu0 0.0
      %465 = vmatpush2.xpose.msra.mxu0 0.0
      %466 = vmatprep.subr.mxu0 0.0
      %467 = vmatpush2.xpose.msra.mxu0 0.0
      %468 = vmatprep.subr.mxu0 0.0
      %469 = vmatpush2.xpose.msra.mxu0 0.0
      %470 = vmatprep.subr.mxu0 0.0
      %471 = vmatpush2.xpose.msra.mxu0 0.0
      %472 = vmatprep.subr.mxu0 0.0
      %473 = vmatpush2.xpose.msra.mxu0 0.0
      %474 = vmatprep.subr.mxu0 0.0
      %475 = vmatpush2.xpose.msra.mxu0 0.0
      %476 = vmatprep.subr.mxu0 0.0
      %477 = vmatpush2.xpose.msra.mxu0 0.0
      %478 = vmatprep.mubr.f32.mxu0 0.0
      %479 = vmatmul.mubr.f32.gmra.mxu0 %v364
      %v480 = vpop.f32.mrf.mxu0
      %v481 = vadd.f32 %v360, %v480
      %v482 = vpop.f32.mrf.mxu0
      %483 = vdwg.mxu0
      %v484 = vld [vmem:[#allocation2] sm:$0xff]
      %485 = vmax.xlane.f32.xlu0 %v481
      %v486 = vpop.xlane.xlu0 %485
      %v487 = vmax.f32 %v484, %v486
      %v488 = vsub.f32 %v484, %v487
      %v489 = vmul.f32 %v488, 1.442695
      %v490 = vpow.pop %v489
      %v491 = vld [vmem:[#allocation3] sm:$0xff]
      %v492 = vmul.f32 %v490, %v491
      %494 = vset.pattern.permute.xlu0 0
      %495 = vperm.xlu0 %494, %v487
      %v496 = vpop.permute.xlu0 %495
      %v498 = vsub.f32 %v481, %v496
      %v499 = vmul.f32 %v498, 1.442695
      %v500 = vpow.pop %v499
      %501 = vadd.xlane.f32.xlu0 %v500
      %v502 = vpop.xlane.xlu0 %501
      %v503 = vadd.f32 %v492, %v502
      %vm504 = vcmask 7168
      %505 = vst.msk [vmem:[#allocation3] sm:$0xff] %vm504, %v503
      %506 = vst.msk [vmem:[#allocation2] sm:$0xff] %vm504, %v487
      %p507 = scmp.eq.s32.totalorder %s20, 2
      // Predicated region
      $region41: #{tpu_custom_call.1} parent=35 // pred_check
        %p508 = pneg %p507
      $region42: #{tpu_custom_call.1} parent=35 // pred_check_branch
        %510 = sbr.rel (%p508) target = $region44
      $region43: #{tpu_custom_call.1} parent=35 // pred_region
        %v511 = vld [vmem:[#allocation2] sm:$0xff]
        %v512 = vld [vmem:[#allocation3] sm:$0xff]
        %v513 = vlog2.pop %v512
        %v514 = vmul.f32 %v513, 0.6931472
        %v515 = vadd.f32 %v511, %v514
        %v516 = vld [vmem:[#allocation4] sm:$0xff]
        %v517 = vsub.f32 %v515, %v516
        %518 = vst.msk [vmem:[%s240] sm:$0xff] %vm504, %v517
      $region44: #{tpu_custom_call.1} parent=35 // pred_fallthru
        _
      %p519 = scmp.lt.s32.totalorder %s19, 2
      %s520 = scalar_select %p519, %s19, 2
      %s521 = smul.addr %s520, 8
      %s522 = scalar_lea.vmem %s4, %s521
      // Predicated region
      $region45: #{tpu_custom_call.1} parent=35 // pred_check
        %p523 = pneg %p144
      $region46: #{tpu_custom_call.1} parent=35 // pred_check_branch
        %525 = sbr.rel (%p523) target = $region48
      $region47: #{tpu_custom_call.1} parent=35 // pred_region
        _
      $region48: #{tpu_custom_call.1} parent=35 // pred_fallthru
        _
    $region36: #{tpu_custom_call.1} parent=5 // pred_fallthru
      _
    %p526 = scmp.le.s32.totalorder 2, %s10
    // Predicated region
    $region49: #{tpu_custom_call.1} parent=5 // pred_check
      %p527 = pneg %p526
    $region50: #{tpu_custom_call.1} parent=5 // pred_check_branch
      %529 = sbr.rel (%p527) target = $region52
    $region51: #{tpu_custom_call.1} parent=5 // pred_region
      %s530 = ssub.s32 %s10, 2
      // Predicated region
      $region53: #{tpu_custom_call.1} parent=51 // pred_check
        %p531 = pneg %p150
      $region54: #{tpu_custom_call.1} parent=51 // pred_check_branch
        %533 = sbr.rel (%p531) target = $region56
      $region55: #{tpu_custom_call.1} parent=51 // pred_region
        %p534 = scmp.lt.s32.totalorder %s21, 2
        %s535 = scalar_select %p534, %s21, 2
        %s536 = smul.addr %s535, 8
        %s537 = scalar_lea.vmem %s4, %s536
      $region56: #{tpu_custom_call.1} parent=51 // pred_fallthru
        _
    $region52: #{tpu_custom_call.1} parent=5 // pred_fallthru
      _
  $region6: #{tpu_custom_call.1} parent=0 // loop_footer
    %s14 = sadd.s32 1, %s10
  $region7: #{tpu_custom_call.1} parent=0 // loop_footer_branch
    %9 = sbr.rel target = $region3
  $region8: #{tpu_custom_call.1} parent=0 // loop_exit
    _

</llo_original>
